<compile_context>
chip_gen: v6e
topology: v6e:2x2x1
jax: 0.10.0
libtpu: 0.0.40
codegen_flags: <defaults>
</compile_context>

<pallas_src>
import jax
import jax.numpy as jnp
from jax.experimental import pallas as pl
from jax.experimental.pallas import tpu as pltpu


def _round_up(x, m):
    return (x + m - 1) // m * m


def _pick_row_tile(B, C, itemsize, *, max_tile=1024,
                   vmem_budget=8 * 1024 * 1024):
    """Largest row tile (multiple of 8) whose double-buffered working set
    for the two (TB, C) input streams fits in `vmem_budget` bytes."""
    per_row = 2 * 2 * C * itemsize + 2 * 2 * 4      # logits + conf (x2 buf) + rel
    tb = vmem_budget // max(per_row, 1)
    tb = max(8, min(max_tile, (tb // 8) * 8))
    tb = min(tb, _round_up(B, 8))                   # don't over-pad tiny batches
    return tb


# ----------------------------------------------------------------------------
# Kernel: row-tiled soft-target cross-entropy with selection weights
# ----------------------------------------------------------------------------
def _partial_ce_kernel(out_ref, conf_ref, rel_ref, loss_ref,
                       lsum_ref, rsum_ref):
    i = pl.program_id(0)

    @pl.when(i == 0)
    def _init():
        lsum_ref[...] = jnp.zeros_like(lsum_ref)
        rsum_ref[...] = jnp.zeros_like(rsum_ref)

    x = out_ref[...].astype(jnp.float32)        # (TB, C) logits
    conf = conf_ref[...].astype(jnp.float32)    # (TB, C) soft targets
    rel = rel_ref[...].astype(jnp.float32)      # (TB, 1) 0/1 selection weights

    # row-wise logsumexp (stable)
    m = jnp.max(x, axis=1, keepdims=True)
    lse = m + jnp.log(jnp.sum(jnp.exp(x - m), axis=1, keepdims=True))

    # loss_row = -(conf * (x - lse)).sum(1) = lse*sum(conf) - sum(conf*x)
    conf_sum = jnp.sum(conf, axis=1, keepdims=True)
    conf_dot = jnp.sum(conf * x, axis=1, keepdims=True)
    loss_vec = lse * conf_sum - conf_dot        # (TB, 1)

    lsum_ref[...] += jnp.sum(loss_vec * rel, axis=0, keepdims=True)
    rsum_ref[...] += jnp.sum(rel, axis=0, keepdims=True)

    @pl.when(i == pl.num_programs(0) - 1)
    def _finalize():
        loss_ref[...] = lsum_ref[...] / rsum_ref[...]


def partial_ce_loss(outputs, conf, rel):
    """sum(rel * ce(outputs, conf)) / sum(rel), via a row-tiled Pallas kernel."""
    B, C = outputs.shape
    tb = _pick_row_tile(B, C, outputs.dtype.itemsize)
    bp = _round_up(_round_up(B, 8), tb)
    if bp != B:
        pad = bp - B
        # zero-padded rows contribute 0 to both numerator and denominator
        outputs = jnp.pad(outputs, ((0, pad), (0, 0)))
        conf = jnp.pad(conf, ((0, pad), (0, 0)))
        rel = jnp.pad(rel, (0, pad))
    rel = rel.reshape(bp, 1).astype(jnp.float32)
    grid = (bp // tb,)

    nbytes = int(outputs.size * outputs.dtype.itemsize
                 + conf.size * conf.dtype.itemsize
                 + rel.size * 4 + 4)
    cost = pl.CostEstimate(flops=8 * bp * C,
                           transcendentals=bp * (C + 1),
                           bytes_accessed=nbytes)

    out = pl.pallas_call(
        _partial_ce_kernel,
        out_shape=jax.ShapeDtypeStruct((1, 1), jnp.float32),
        grid=grid,
        in_specs=[
            pl.BlockSpec((tb, C), lambda i: (i, 0)),
            pl.BlockSpec((tb, C), lambda i: (i, 0)),
            pl.BlockSpec((tb, 1), lambda i: (i, 0)),
        ],
        out_specs=pl.BlockSpec((1, 1), lambda i: (0, 0)),
        scratch_shapes=[pltpu.VMEM((1, 1), jnp.float32),
                        pltpu.VMEM((1, 1), jnp.float32)],
        compiler_params=pltpu.CompilerParams(
            dimension_semantics=("arbitrary",)),
        cost_estimate=cost,
    )(outputs, conf, rel)
    return out[0, 0]


# ----------------------------------------------------------------------------
# Module wrapper mirroring PiCO's partial_loss
# ----------------------------------------------------------------------------
class PartialLoss:
    """JAX/Pallas port of PiCO's `partial_loss` module (forward pass)."""

    def __init__(self, confidence, conf_ema_m=0.99):
        self.confidence = jnp.asarray(confidence)
        self.conf_ema_m = conf_ema_m
        self.num_class = self.confidence.shape[1]

    def set_conf_ema_m(self, epoch, epochs, conf_ema_range):
        start, end = conf_ema_range
        self.conf_ema_m = 1.0 * epoch / epochs * (end - start) + start

    def __call__(self, outputs, index, is_rel=None):
        return self.forward(outputs, index, is_rel)

    def forward(self, outputs, index, is_rel=None):
        outputs = jnp.asarray(outputs)
        index = jnp.asarray(index)
        B = outputs.shape[0]
        conf = self.confidence[index]          # row gather (single XLA gather)
        if is_rel is None:
            rel = jnp.ones((B,), jnp.float32)
        else:
            is_rel = jnp.asarray(is_rel)
            if is_rel.dtype == jnp.bool_:
                rel = is_rel.astype(jnp.float32)
            else:                               # integer row selection
                rel = jnp.zeros((B,), jnp.float32).at[is_rel].set(1.0)
        return partial_ce_loss(outputs, conf, rel)

    def confidence_update(self, temp_un_conf, batch_index, batchY):
        # Stateful training-time EMA update (not part of forward); plain JAX.
        prot_pred = jnp.argmax(jnp.asarray(temp_un_conf) * jnp.asarray(batchY),
                               axis=1)
        pseudo = jax.nn.one_hot(prot_pred, self.num_class,
                                dtype=self.confidence.dtype)
        cur = self.confidence[batch_index]
        self.confidence = self.confidence.at[batch_index].set(
            self.conf_ema_m * cur + (1.0 - self.conf_ema_m) * pseudo)


# ----------------------------------------------------------------------------
# Pure-JAX reference (transcription of the PyTorch forward) for validation
# ----------------------------------------------------------------------------
def _ref_partial_loss(outputs, confidence, index, is_rel=None):
    conf = confidence[index]
    logsm = jax.nn.log_softmax(outputs, axis=1)
    loss_vec = -(logsm * conf).sum(axis=1)
    if is_rel is None:
        return loss_vec.mean()
    rel = jnp.asarray(is_rel).astype(jnp.float32)
    return (loss_vec * rel).sum() / rel.sum()   # == loss_vec[is_rel].mean()


if __name__ == "__main__":
    key = jax.random.PRNGKey(0)
    k1, k2, k3 = jax.random.split(key, 3)

    N, C, B = 64, 10, 8                      # dataset rows, classes, batch
    confidence = jax.nn.softmax(
        jax.random.normal(k1, (N, C), jnp.float32), axis=1)
    outputs = jax.random.normal(k2, (B, C), jnp.float32)
    index = jax.random.randint(k3, (B,), 0, N)
    is_rel = jnp.array([True, False, True, True, False, True, False, True])

    mod = PartialLoss(confidence)

    # --- is_rel is None: plain mean ---
    loss_all = jax.block_until_ready(mod(outputs, index))
    ref_all = _ref_partial_loss(outputs, confidence, index)

    # --- boolean selection ---
    loss_sel = jax.block_until_ready(mod(outputs, index, is_rel=is_rel))
    ref_sel = _ref_partial_loss(outputs, confidence, index, is_rel=is_rel)

    assert jnp.allclose(loss_all, ref_all, rtol=1e-5, atol=1e-5), (
        loss_all, ref_all)
    assert jnp.allclose(loss_sel, ref_sel, rtol=1e-5, atol=1e-5), (
        loss_sel, ref_sel)

    print("KERNEL_OK")
</pallas_src>

<mosaic_0001>
module attributes {stable_mosaic.version = 11 : i64} {
  func.func @_partial_ce_kernel(%arg0: i32, %arg1: memref<8x10xf32, #tpu.memory_space<vmem>>, %arg2: memref<8x10xf32, #tpu.memory_space<vmem>>, %arg3: memref<8x1xf32, #tpu.memory_space<vmem>>, %arg4: memref<1x1xf32, #tpu.memory_space<vmem>>, %arg5: memref<1x1xf32, #tpu.memory_space<vmem>>, %arg6: memref<1x1xf32, #tpu.memory_space<vmem>>) attributes {dimension_semantics = [#tpu.dimension_semantics<arbitrary>], iteration_bounds = array<i64: 1>, scalar_prefetch = 0 : i64, scratch_operands = 2 : i64, tpu.core_type = #tpu.core_type<tc>, window_params = [{transform_indices = @transform_0, window_bounds = array<i64: 8, 10>}, {transform_indices = @transform_1, window_bounds = array<i64: 8, 10>}, {transform_indices = @transform_2, window_bounds = array<i64: 8, 1>}, {pipeline_mode = #tpu.pipeline_mode<synchronous>, transform_indices = @transform_3, window_bounds = array<i64: 1, 1>}]} {
    %c0_i32 = arith.constant 0 : i32
    %0 = arith.cmpi eq, %arg0, %c0_i32 : i32
    %1 = arith.extui %0 : i1 to i32
    %c0_i32_0 = arith.constant 0 : i32
    %2 = arith.cmpi ne, %1, %c0_i32_0 : i32
    scf.if %2 {
      %cst_21 = arith.constant 0.000000e+00 : f32
      %36 = vector.broadcast %cst_21 : f32 to vector<1x1xf32>
      %c0_22 = arith.constant 0 : index
      %c0_23 = arith.constant 0 : index
      %37 = vector.load %arg5[%c0_22, %c0_23] : memref<1x1xf32, #tpu.memory_space<vmem>>, vector<1x1xf32>
      tpu.vector_store %arg5[%c0_22, %c0_23], %36 {strides = array<i32>} : memref<1x1xf32, #tpu.memory_space<vmem>>, vector<1x1xf32>,
      %cst_24 = arith.constant 0.000000e+00 : f32
      %38 = vector.broadcast %cst_24 : f32 to vector<1x1xf32>
      %c0_25 = arith.constant 0 : index
      %c0_26 = arith.constant 0 : index
      %39 = vector.load %arg6[%c0_25, %c0_26] : memref<1x1xf32, #tpu.memory_space<vmem>>, vector<1x1xf32>
      tpu.vector_store %arg6[%c0_25, %c0_26], %38 {strides = array<i32>} : memref<1x1xf32, #tpu.memory_space<vmem>>, vector<1x1xf32>,
    } else {
    }
    %c0 = arith.constant 0 : index
    %c0_1 = arith.constant 0 : index
    %3 = vector.load %arg1[%c0, %c0_1] : memref<8x10xf32, #tpu.memory_space<vmem>>, vector<8x10xf32>
    %c0_2 = arith.constant 0 : index
    %c0_3 = arith.constant 0 : index
    %4 = vector.load %arg2[%c0_2, %c0_3] : memref<8x10xf32, #tpu.memory_space<vmem>>, vector<8x10xf32>
    %c0_4 = arith.constant 0 : index
    %c0_5 = arith.constant 0 : index
    %5 = vector.load %arg3[%c0_4, %c0_5] : memref<8x1xf32, #tpu.memory_space<vmem>>, vector<8x1xf32>
    %cst = arith.constant dense<0xFF800000> : vector<8xf32>
    %6 = vector.multi_reduction <maximumf>, %3, %cst [1] : vector<8x10xf32> to vector<8xf32>
    %7 = vector.shape_cast %6 : vector<8xf32> to vector<8x1xf32>
    %8 = vector.broadcast %7 : vector<8x1xf32> to vector<8x10xf32>
    %9 = arith.subf %3, %8 : vector<8x10xf32>
    %10 = math.exp %9 : vector<8x10xf32>
    %cst_6 = arith.constant dense<0.000000e+00> : vector<8xf32>
    %11 = vector.multi_reduction <add>, %10, %cst_6 [1] : vector<8x10xf32> to vector<8xf32>
    %12 = vector.shape_cast %11 : vector<8xf32> to vector<8x1xf32>
    %13 = math.log %12 : vector<8x1xf32>
    %14 = arith.addf %7, %13 : vector<8x1xf32>
    %cst_7 = arith.constant dense<0.000000e+00> : vector<8xf32>
    %15 = vector.multi_reduction <add>, %4, %cst_7 [1] : vector<8x10xf32> to vector<8xf32>
    %16 = vector.shape_cast %15 : vector<8xf32> to vector<8x1xf32>
    %17 = arith.mulf %4, %3 : vector<8x10xf32>
    %cst_8 = arith.constant dense<0.000000e+00> : vector<8xf32>
    %18 = vector.multi_reduction <add>, %17, %cst_8 [1] : vector<8x10xf32> to vector<8xf32>
    %19 = vector.shape_cast %18 : vector<8xf32> to vector<8x1xf32>
    %20 = arith.mulf %14, %16 : vector<8x1xf32>
    %21 = arith.subf %20, %19 : vector<8x1xf32>
    %c0_9 = arith.constant 0 : index
    %c0_10 = arith.constant 0 : index
    %22 = vector.load %arg5[%c0_9, %c0_10] : memref<1x1xf32, #tpu.memory_space<vmem>>, vector<1x1xf32>
    %23 = arith.mulf %21, %5 : vector<8x1xf32>
    %cst_11 = arith.constant dense<0.000000e+00> : vector<1xf32>
    %24 = vector.multi_reduction <add>, %23, %cst_11 [0] : vector<8x1xf32> to vector<1xf32>
    %25 = vector.shape_cast %24 : vector<1xf32> to vector<1x1xf32>
    %26 = arith.addf %22, %25 : vector<1x1xf32>
    %c0_12 = arith.constant 0 : index
    %c0_13 = arith.constant 0 : index
    %27 = vector.load %arg5[%c0_12, %c0_13] : memref<1x1xf32, #tpu.memory_space<vmem>>, vector<1x1xf32>
    tpu.vector_store %arg5[%c0_12, %c0_13], %26 {strides = array<i32>} : memref<1x1xf32, #tpu.memory_space<vmem>>, vector<1x1xf32>,
    %c0_14 = arith.constant 0 : index
    %c0_15 = arith.constant 0 : index
    %28 = vector.load %arg6[%c0_14, %c0_15] : memref<1x1xf32, #tpu.memory_space<vmem>>, vector<1x1xf32>
    %cst_16 = arith.constant dense<0.000000e+00> : vector<1xf32>
    %29 = vector.multi_reduction <add>, %5, %cst_16 [0] : vector<8x1xf32> to vector<1xf32>
    %30 = vector.shape_cast %29 : vector<1xf32> to vector<1x1xf32>
    %31 = arith.addf %28, %30 : vector<1x1xf32>
    %c0_17 = arith.constant 0 : index
    %c0_18 = arith.constant 0 : index
    %32 = vector.load %arg6[%c0_17, %c0_18] : memref<1x1xf32, #tpu.memory_space<vmem>>, vector<1x1xf32>
    tpu.vector_store %arg6[%c0_17, %c0_18], %31 {strides = array<i32>} : memref<1x1xf32, #tpu.memory_space<vmem>>, vector<1x1xf32>,
    %c0_i32_19 = arith.constant 0 : i32
    %33 = arith.cmpi eq, %arg0, %c0_i32_19 : i32
    %34 = arith.extui %33 : i1 to i32
    %c0_i32_20 = arith.constant 0 : i32
    %35 = arith.cmpi ne, %34, %c0_i32_20 : i32
    scf.if %35 {
      %c0_21 = arith.constant 0 : index
      %c0_22 = arith.constant 0 : index
      %36 = vector.load %arg5[%c0_21, %c0_22] : memref<1x1xf32, #tpu.memory_space<vmem>>, vector<1x1xf32>
      %c0_23 = arith.constant 0 : index
      %c0_24 = arith.constant 0 : index
      %37 = vector.load %arg6[%c0_23, %c0_24] : memref<1x1xf32, #tpu.memory_space<vmem>>, vector<1x1xf32>
      %38 = arith.divf %36, %37 : vector<1x1xf32>
      %c0_25 = arith.constant 0 : index
      %c0_26 = arith.constant 0 : index
      %39 = vector.load %arg4[%c0_25, %c0_26] : memref<1x1xf32, #tpu.memory_space<vmem>>, vector<1x1xf32>
      tpu.vector_store %arg4[%c0_25, %c0_26], %38 {strides = array<i32>} : memref<1x1xf32, #tpu.memory_space<vmem>>, vector<1x1xf32>,
    } else {
    }
    return
  }
  func.func @transform_0(%arg0: i32) -> (i32, i32) {
    %c0_i32 = arith.constant 0 : i32
    %c0_i32_0 = arith.constant 0 : i32
    return %arg0, %c0_i32 : i32, i32
  }
  func.func @transform_1(%arg0: i32) -> (i32, i32) {
    %c0_i32 = arith.constant 0 : i32
    %c0_i32_0 = arith.constant 0 : i32
    return %arg0, %c0_i32 : i32, i32
  }
  func.func @transform_2(%arg0: i32) -> (i32, i32) {
    %c0_i32 = arith.constant 0 : i32
    %c0_i32_0 = arith.constant 0 : i32
    return %arg0, %c0_i32 : i32, i32
  }
  func.func @transform_3(%arg0: i32) -> (i32, i32) {
    %c0_i32 = arith.constant 0 : i32
    %c0_i32_0 = arith.constant 0 : i32
    %c0_i32_1 = arith.constant 0 : i32
    return %c0_i32, %c0_i32_0 : i32, i32
  }
}

</mosaic_0001>

<llo_original>
// kernel: tpu_custom_call.1
$region0: #{tpu_custom_call.1}
  #allocation0 [shape = 'u32[]', space=smem, size = 0x4, offset = 0x4, fixed_abs, tag = 'smem constant byte address 0x4 - core index']
  #allocation1 [shape = 'u32[144,128]{1,0:T(1,128)}', space=vmem, size = 0x12000, scoped, tag = 'internal scratch']
  #allocation2 [shape = 'f32[1,1]{1,0:T(1,128)}', space=vmem, size = 0x200, scoped, tag = 'scratch operand']
  #allocation3 [shape = 'f32[1,1]{1,0:T(1,128)}', space=vmem, size = 0x200, scoped, tag = 'scratch operand']
  %s0 = inlined_call_operand.vmem [shape: f32[8,10], index: 0, kind: input, shape index: {}]
  %s1 = inlined_call_operand.hbm [shape: f32[8,10], index: 1, kind: input, shape index: {}]
  %s2 = inlined_call_operand.vmem [shape: f32[8,1], index: 2, kind: input, shape index: {}]
  %s3 = inlined_call_operand.hbm [shape: f32[1,1], index: 3, kind: output, shape index: {}]
  %s4 = sld [smem:[#allocation0]]
  $region34: #{tpu_custom_call.1} parent=0
    _
  %s6 = ssub.s32 1, %s4
  %s7 = scalar_select 0, %s6, %s4
  $region1: #{tpu_custom_call.1} parent=0
    #allocation4 [shape = 'u8[4096]{0}', space=vmem, size = 0x1000, scoped, tag = 'input window, operand 1, single buffered']
    #allocation5 [shape = 's32[1]{0}', space=sflag, size = 0x4, scoped, tag = 'scoped memory for tpu_custom_call.1']
    #allocation6 [shape = 's32[1]{0}', space=sflag, size = 0x4, scoped, tag = 'scoped memory for tpu_custom_call.1']
    #allocation7 [shape = 'u8[512]{0}', space=vmem, size = 0x400, scoped, tag = 'output window, operand 0, single buffered']
    %8 = vsyncpa [#allocation5], 0
    %9 = vsyncpa [#allocation6], 0
    // Predicated region
    $region2: #{tpu_custom_call.1} parent=1 // pred_check
      _
    $region3: #{tpu_custom_call.1} parent=1 // pred_check_branch
      %11 = sbr.rel (0) target = $region5
    $region4: #{tpu_custom_call.1} parent=1 // pred_region
      _
    $region5: #{tpu_custom_call.1} parent=1 // pred_fallthru
      _
    // Predicated region
    $region6: #{tpu_custom_call.1} parent=1 // pred_check
      _
    $region7: #{tpu_custom_call.1} parent=1 // pred_check_branch
      %13 = sbr.rel (0) target = $region9
    $region8: #{tpu_custom_call.1} parent=1 // pred_region
      %s15 = ssub.s32 128, 128
      %16 = vsyncadd [#allocation5], %s15
      %s18 = sshll.u32 [#allocation4], 4
      %s19 = int_to_ptr.vmem [resolvable:$true] %s18
      %21 = dma.hbm_to_vmem [thread:$0]  %s1, 128, %s19, [#allocation5]
    $region9: #{tpu_custom_call.1} parent=1 // pred_fallthru
      _
    // Predicated region
    $region10: #{tpu_custom_call.1} parent=1 // pred_check
      _
    $region11: #{tpu_custom_call.1} parent=1 // pred_check_branch
      %23 = sbr.rel (0) target = $region13
    $region12: #{tpu_custom_call.1} parent=1 // pred_region
      _
    $region13: #{tpu_custom_call.1} parent=1 // pred_fallthru
      _
    // Predicated region
    $region14: #{tpu_custom_call.1} parent=1 // pred_check
      _
    $region15: #{tpu_custom_call.1} parent=1 // pred_check_branch
      %25 = sbr.rel (0) target = $region17
    $region16: #{tpu_custom_call.1} parent=1 // pred_region
      %26 = dma.done [#allocation5], 128
    $region17: #{tpu_custom_call.1} parent=1 // pred_fallthru
      _
    %p27 = scmp.eq.s32.totalorder 0, 0
    // Predicated region
    $region18: #{tpu_custom_call.1} parent=1 // pred_check
      %p28 = pneg %p27
    $region19: #{tpu_custom_call.1} parent=1 // pred_check_branch
      %30 = sbr.rel (%p28) target = $region21
    $region20: #{tpu_custom_call.1} parent=1 // pred_region
      %vm31 = vcmask 0
      %32 = vst.msk [vmem:[#allocation2] sm:$0x1] %vm31, 0.0
      %33 = vst.msk [vmem:[#allocation3] sm:$0x1] %vm31, 0.0
    $region21: #{tpu_custom_call.1} parent=1 // pred_fallthru
      _
    %v34 = vld [vmem:[%s0] sm:$0xff]
    %v35 = vld [vmem:[#allocation4] sm:$0xff]
    %v36 = vld [vmem:[%s2] sm:$0xff]
    %vm37 = vcmask 80896
    %v38 = vsel %vm37, %v34, -inf
    %39 = vmax.xlane.f32.xlu0 %v38
    %v40 = vpop.xlane.xlu0 %39
    %v41 = vsub.f32 %v34, %v40
    %v42 = vmul.f32 %v41, 1.442695
    %v43 = vpow.pop %v42
    %v44 = vsel %vm37, %v43, 0.0
    %45 = vadd.xlane.f32.xlu0 %v44
    %v46 = vpop.xlane.xlu0 %45
    %v47 = vlog2.pop %v46
    %v48 = vmul.f32 %v47, 0.6931472
    %v49 = vadd.f32 %v40, %v48
    %v50 = vsel %vm37, %v35, 0.0
    %51 = vadd.xlane.f32.xlu0 %v50
    %v52 = vpop.xlane.xlu0 %51
    %v53 = vmul.f32 %v35, %v34
    %v54 = vsel %vm37, %v53, 0.0
    %55 = vadd.xlane.f32.xlu0 %v54
    %v56 = vpop.xlane.xlu0 %55
    %v57 = vmul.f32 %v49, %v52
    %v58 = vsub.f32 %v57, %v56
    %v59 = vld [vmem:[#allocation2] sm:$0x1]
    %v60 = vmul.f32 %v58, %v36
    %vm61 = vcmask 7168
    %v62 = vsel %vm61, %v60, 0.0
    %v63 = vrot.slane %v62, 4
    %v64 = vadd.f32 %v62, %v63
    %v65 = vrot.slane %v64, 2
    %v66 = vadd.f32 %v64, %v65
    %v67 = vrot.slane %v66, 1
    %v68 = vadd.f32 %v66, %v67
    %v69 = vadd.f32 %v59, %v68
    %vm70 = vcmask 0
    %71 = vst.msk [vmem:[#allocation2] sm:$0x1] %vm70, %v69
    %v72 = vld [vmem:[#allocation3] sm:$0x1]
    %v73 = vsel %vm61, %v36, 0.0
    %v74 = vrot.slane %v73, 4
    %v75 = vadd.f32 %v73, %v74
    %v76 = vrot.slane %v75, 2
    %v77 = vadd.f32 %v75, %v76
    %v78 = vrot.slane %v77, 1
    %v79 = vadd.f32 %v77, %v78
    %v80 = vadd.f32 %v72, %v79
    %81 = vst.msk [vmem:[#allocation3] sm:$0x1] %vm70, %v80
    // Predicated region
    $region22: #{tpu_custom_call.1} parent=1 // pred_check
      %p82 = pneg %p27
    $region23: #{tpu_custom_call.1} parent=1 // pred_check_branch
      %84 = sbr.rel (%p82) target = $region25
    $region24: #{tpu_custom_call.1} parent=1 // pred_region
      %v85 = vld [vmem:[#allocation2] sm:$0x1]
      %v86 = vld [vmem:[#allocation3] sm:$0x1]
      %v87 = vrcp.pop %v86
      %v88 = vmul.f32 %v85, %v87
      %89 = vst.msk [vmem:[#allocation7] sm:$0x1] %vm70, %v88
    $region25: #{tpu_custom_call.1} parent=1 // pred_fallthru
      _
    // Predicated region
    $region26: #{tpu_custom_call.1} parent=1 // pred_check
      _
    $region27: #{tpu_custom_call.1} parent=1 // pred_check_branch
      %91 = sbr.rel (0) target = $region29
    $region28: #{tpu_custom_call.1} parent=1 // pred_region
      %s93 = ssub.s32 16, 16
      %94 = vsyncadd [#allocation6], %s93
      %s96 = sshll.u32 [#allocation7], 4
      %s97 = int_to_ptr.vmem [resolvable:$true] %s96
      %99 = dma.vmem_to_hbm [thread:$0]  %s97, 16, %s3, [#allocation6]
    $region29: #{tpu_custom_call.1} parent=1 // pred_fallthru
      _
    // Predicated region
    $region30: #{tpu_custom_call.1} parent=1 // pred_check
      _
    $region31: #{tpu_custom_call.1} parent=1 // pred_check_branch
      %101 = sbr.rel (0) target = $region33
    $region32: #{tpu_custom_call.1} parent=1 // pred_region
      %102 = dma.done [#allocation6], 16
    $region33: #{tpu_custom_call.1} parent=1 // pred_fallthru
      _
    %103 = vsyncpa [#allocation5], 1
    %104 = vsyncpa [#allocation6], 1

</llo_original>
